<compile_context>
chip_gen: v5e
topology: v5e:2x2
jax: 0.10.0
libtpu: 0.0.40
codegen_flags: <defaults>
</compile_context>

<pallas_src>
import functools

import jax
import jax.numpy as jnp
from jax.experimental import pallas as pl
from jax.experimental.pallas import tpu as pltpu


# ----------------------------------------------------------------------------
# Interpolation-matrix construction (plain JAX glue, cached).
# ----------------------------------------------------------------------------
def _round_up(n: int, m: int) -> int:
    return ((n + m - 1) // m) * m


def _linear_resize_matrix(in_size: int, out_size: int) -> jnp.ndarray:
    """(in_size, out_size) matrix for F.interpolate(mode='linear',
    align_corners=False) along the last axis:  out = x @ M."""
    scale = in_size / out_size
    j = jnp.arange(out_size, dtype=jnp.float32)
    src = (j + 0.5) * scale - 0.5
    src = jnp.maximum(src, 0.0)                      # PyTorch clamps negatives
    i0 = jnp.floor(src).astype(jnp.int32)
    i0 = jnp.clip(i0, 0, in_size - 1)
    i1 = jnp.minimum(i0 + 1, in_size - 1)
    w1 = src - i0.astype(jnp.float32)
    w0 = 1.0 - w1
    rows = jnp.arange(in_size, dtype=jnp.int32)[:, None]
    m = (rows == i0[None, :]).astype(jnp.float32) * w0[None, :] \
      + (rows == i1[None, :]).astype(jnp.float32) * w1[None, :]
    return m


@functools.lru_cache(maxsize=None)
def _resize_weights(length, downsample_size, original_size, dtype_name, fused):
    """Resize matrices in the matmul dtype (matches activations), cached."""
    dtype = jnp.dtype(dtype_name)
    w_down = _linear_resize_matrix(length, downsample_size)
    w_up = _linear_resize_matrix(downsample_size, original_size)
    if fused:
        return ((w_down @ w_up).astype(dtype),)
    return (w_down.astype(dtype), w_up.astype(dtype))


# ----------------------------------------------------------------------------
# Pallas kernels.
# ----------------------------------------------------------------------------
def _fused_kernel(x_ref, w_ref, o_ref):
    o_ref[...] = jnp.dot(x_ref[...], w_ref[...],
                         preferred_element_type=jnp.float32).astype(o_ref.dtype)


def _two_matmul_kernel(x_ref, w_down_ref, w_up_ref, o_ref):
    y1 = jnp.dot(x_ref[...], w_down_ref[...],
                 preferred_element_type=jnp.float32)
    # Keep the second matmul at the weights' native MXU rate (no-op for f32).
    y1 = y1.astype(w_up_ref.dtype)
    o_ref[...] = jnp.dot(y1, w_up_ref[...],
                         preferred_element_type=jnp.float32).astype(o_ref.dtype)


# ----------------------------------------------------------------------------
# Planning helpers (generation-aware VMEM budget, path + tile selection).
# ----------------------------------------------------------------------------
def _vmem_caps():
    cap = 64 << 20                      # conservative default (v7x-sized VMEM)
    try:
        info = pltpu.get_tpu_info()
        cap = int(getattr(info, "vmem_capacity_bytes", cap)) or cap
    except Exception:
        pass
    budget = (cap * 3) // 8             # ~24 MiB on v7x, ~48 MiB on v5e/v6e
    limit_cap = (cap * 3) // 4          # ~48 MiB on v7x, ~96 MiB on v5e/v6e
    return budget, limit_cap


def _use_fused_path(length, downsample_size, original_size, w_itemsize, budget):
    d_eff = _round_up(downsample_size, 128)           # MXU-effective inner dim
    fused_flops = length * original_size
    two_flops = d_eff * (length + original_size)
    fused_w_bytes = 2 * w_itemsize * length * original_size
    two_w_bytes = 2 * w_itemsize * downsample_size * (length + original_size)
    if fused_w_bytes > budget:
        return False
    if two_w_bytes > budget:
        return True
    return fused_flops <= two_flops


def _plan_tiling(c, x_itemsize, w_itemsize, length, d_mid, original_size, budget):
    """Pick a sublane-aligned channel tile that fits the VMEM budget."""
    align = {4: 8, 2: 16, 1: 32}.get(x_itemsize, 8)
    if d_mid is None:                                  # fused single matmul
        w_bytes = 2 * w_itemsize * length * original_size   # conservative 2x
        inter_per_row = 0
    else:                                              # two-matmul path
        w_bytes = 2 * w_itemsize * d_mid * (length + original_size)
        inter_per_row = 4 * d_mid                      # f32 intermediate
    per_row = 2 * x_itemsize * length + 2 * x_itemsize * original_size \
        + inter_per_row

    if c <= align:
        tile_c = c          # single full-extent block (block dim == array dim)
    else:
        # Keep >= 2 grid steps whenever C allows: v7x megacore sharding and
        # input-DMA / compute overlap need more than one step.
        cap_tile = _round_up(pl.cdiv(c, 2), align)
        tile_c = align
        for cand in (2048, 1024, 512, 256, 128, 64, 32, 16, 8):
            if cand % align or cand > cap_tile:
                continue
            if w_bytes + cand * per_row <= budget:
                tile_c = cand
                break
    need = w_bytes + tile_c * per_row
    return tile_c, need


# ----------------------------------------------------------------------------
# pallas_call wrapper.
# ----------------------------------------------------------------------------
_SINGLE_BUFFER_WEIGHTS_OK = None   # tri-state compat memo for pl.Buffered(1)


def _pallas_resize(x2, weights, kernel, tile_c, grid, length, original_size,
                   out_dtype, vmem_limit, flops, bytes_accessed,
                   single_buffer_weights):
    w_kwargs = {"pipeline_mode": pl.Buffered(1)} if single_buffer_weights else {}
    in_specs = [pl.BlockSpec((tile_c, length), lambda i: (i, 0))]
    in_specs += [pl.BlockSpec(w.shape, lambda i: (0, 0), **w_kwargs)
                 for w in weights]
    c = x2.shape[0]
    return pl.pallas_call(
        kernel,
        out_shape=jax.ShapeDtypeStruct((c, original_size), out_dtype),
        grid=grid,
        in_specs=in_specs,
        out_specs=pl.BlockSpec((tile_c, original_size), lambda i: (i, 0)),
        compiler_params=pltpu.CompilerParams(
            dimension_semantics=("parallel",),
            vmem_limit_bytes=vmem_limit,
        ),
        cost_estimate=pl.CostEstimate(flops=flops, transcendentals=0,
                                      bytes_accessed=bytes_accessed),
    )(x2, *weights)


def downsample_reconstruct(x: jnp.ndarray, downsample_size: int,
                           original_size: int) -> jnp.ndarray:
    """Pallas equivalent of DownSampleReconstruct(downsample_size, original_size)(x).

    x: (..., L).  Returns (..., original_size) in x.dtype.
    """
    global _SINGLE_BUFFER_WEIGHTS_OK

    orig_shape = x.shape
    length = orig_shape[-1]
    x2 = x.reshape((-1, length))
    c = x2.shape[0]

    w_dtype = x.dtype if jnp.issubdtype(x.dtype, jnp.floating) else jnp.float32
    x_itemsize = jnp.dtype(x.dtype).itemsize
    w_itemsize = jnp.dtype(w_dtype).itemsize

    budget, limit_cap = _vmem_caps()
    fused = _use_fused_path(length, downsample_size, original_size,
                            w_itemsize, budget)
    weights = _resize_weights(length, downsample_size, original_size,
                              jnp.dtype(w_dtype).name, fused)
    d_mid = None if fused else downsample_size

    tile_c, need = _plan_tiling(c, x_itemsize, w_itemsize, length, d_mid,
                                original_size, budget)
    grid = (pl.cdiv(c, tile_c),)

    if fused:
        flops = 2 * c * length * original_size
    else:
        flops = 2 * c * downsample_size * (length + original_size)
    bytes_accessed = x_itemsize * c * (length + original_size) \
        + w_itemsize * sum(int(w.size) for w in weights)

    vmem_limit = int(min(limit_cap, max(32 << 20, 2 * need)))
    if need > limit_cap:
        # TODO(synk): very long sequences need a K/N grid split with an
        # accumulator (reduction axis last + pl.when init/finalize) instead of
        # fully-resident weights; best-effort clamp for now.
        vmem_limit = int(limit_cap)

    kernel = _fused_kernel if fused else _two_matmul_kernel
    call_args = (x2, weights, kernel, tile_c, grid, length, original_size,
                 x.dtype, vmem_limit, flops, bytes_accessed)

    # Single-buffer the resident weights only when they are big enough to
    # matter; fall back to the default pipeline if this JAX version rejects it.
    w_single_bytes = w_itemsize * sum(int(w.size) for w in weights)
    want_single = (w_single_bytes > (1 << 20)
                   and _SINGLE_BUFFER_WEIGHTS_OK is not False)
    if want_single:
        try:
            out2 = _pallas_resize(*call_args, single_buffer_weights=True)
            _SINGLE_BUFFER_WEIGHTS_OK = True
        except Exception:
            _SINGLE_BUFFER_WEIGHTS_OK = False
            out2 = _pallas_resize(*call_args, single_buffer_weights=False)
    else:
        out2 = _pallas_resize(*call_args, single_buffer_weights=False)

    return out2.reshape(orig_shape[:-1] + (original_size,))


# ----------------------------------------------------------------------------
# RandomTF wrapper: apply the transform with probability p (host-side coin).
# ----------------------------------------------------------------------------
class RandomTF:
    """Matches torch.rand(1).item() < p: the coin flip is host-side Python
    control flow (a device->host sync), exactly like the PyTorch module."""

    def __init__(self, transform, p=0.5):
        self.transform = transform
        self.p = p

    def __call__(self, x, key):
        coin = float(jax.random.uniform(key, ()))
        if coin < self.p:
            return self.transform(x)
        return x


def _reference(x, downsample_size, original_size):
    """Pure-JAX reference of the two linear resizes (for sanity checking)."""
    w_down = _linear_resize_matrix(x.shape[-1], downsample_size)
    w_up = _linear_resize_matrix(downsample_size, original_size)
    return x.astype(jnp.float32) @ w_down @ w_up


if __name__ == "__main__":
    key = jax.random.PRNGKey(0)
    kx1, kx3, kcoin = jax.random.split(key, 3)

    # Case 1: small f32 input -> fused single-matmul path.
    x1 = jax.random.normal(kx1, (2, 4, 16), dtype=jnp.float32)
    out1 = jax.block_until_ready(downsample_reconstruct(x1, 8, 16))
    ref1 = _reference(x1, 8, 16)
    assert out1.shape == (2, 4, 16)
    assert jnp.allclose(out1, ref1, atol=1e-2, rtol=1e-2)

    # Case 2: bf16 activations -> bf16 weights with f32 accumulation.
    x2 = x1.astype(jnp.bfloat16)
    out2 = jax.block_until_ready(downsample_reconstruct(x2, 8, 16))
    assert out2.dtype == jnp.bfloat16
    assert jnp.allclose(out2.astype(jnp.float32), ref1, atol=5e-2, rtol=5e-2)

    # Case 3: longer sequence -> two-matmul path (D << L,O), ragged channel
    # tail (20 rows, tile_c 16 -> partial last block), no wrapper padding.
    x3 = jax.random.normal(kx3, (5, 4, 512), dtype=jnp.float32)
    out3 = jax.block_until_ready(downsample_reconstruct(x3, 8, 512))
    ref3 = _reference(x3, 8, 512)
    assert out3.shape == (5, 4, 512)
    assert jnp.allclose(out3, ref3, atol=1e-2, rtol=1e-2)

    # RandomTF semantics: apply the transform with probability p.
    transform = lambda a: downsample_reconstruct(a, 8, 16)
    y_hit = jax.block_until_ready(RandomTF(transform, p=1.0)(x1, kcoin))
    y_miss = RandomTF(transform, p=0.0)(x1, kcoin)
    assert jnp.allclose(y_hit, ref1, atol=1e-2, rtol=1e-2)
    assert y_miss is x1
    _ = RandomTF(transform, p=0.5)(x1, kcoin)   # either branch is valid

    print("KERNEL_OK")
</pallas_src>

<mosaic_0001>
module attributes {stable_mosaic.version = 11 : i64} {
  func.func @_fused_kernel(%arg0: i32, %arg1: memref<8x16xf32, #tpu.memory_space<vmem>>, %arg2: memref<16x16xf32, #tpu.memory_space<vmem>>, %arg3: memref<8x16xf32, #tpu.memory_space<vmem>>) attributes {dimension_semantics = [#tpu.dimension_semantics<parallel>], iteration_bounds = array<i64: 1>, scalar_prefetch = 0 : i64, scratch_operands = 0 : i64, tpu.core_type = #tpu.core_type<tc>, window_params = [{transform_indices = @transform_0, window_bounds = array<i64: 8, 16>}, {pipeline_mode = #tpu.pipeline_mode<synchronous>, transform_indices = @transform_1, window_bounds = array<i64: 16, 16>}, {transform_indices = @transform_2, window_bounds = array<i64: 8, 16>}]} {
    %c0 = arith.constant 0 : index
    %c0_0 = arith.constant 0 : index
    %0 = vector.load %arg1[%c0, %c0_0] : memref<8x16xf32, #tpu.memory_space<vmem>>, vector<8x16xf32>
    %c0_1 = arith.constant 0 : index
    %c0_2 = arith.constant 0 : index
    %1 = vector.load %arg2[%c0_1, %c0_2] : memref<16x16xf32, #tpu.memory_space<vmem>>, vector<16x16xf32>
    %cst = arith.constant dense<0.000000e+00> : vector<8x16xf32>
    %2 = tpu.matmul %0, %1, %cst {dimension_numbers = #tpu.dot_dimension_numbers<[1], [0], [0], [1], [0, 0, 1, 1], [], []>} : vector<8x16xf32>, vector<16x16xf32>, vector<8x16xf32> -> vector<8x16xf32>
    %c0_3 = arith.constant 0 : index
    %c0_4 = arith.constant 0 : index
    %3 = vector.load %arg3[%c0_3, %c0_4] : memref<8x16xf32, #tpu.memory_space<vmem>>, vector<8x16xf32>
    tpu.vector_store %arg3[%c0_3, %c0_4], %2 {strides = array<i32>} : memref<8x16xf32, #tpu.memory_space<vmem>>, vector<8x16xf32>,
    return
  }
  func.func @transform_0(%arg0: i32) -> (i32, i32) {
    %c0_i32 = arith.constant 0 : i32
    %c0_i32_0 = arith.constant 0 : i32
    return %arg0, %c0_i32 : i32, i32
  }
  func.func @transform_1(%arg0: i32) -> (i32, i32) {
    %c0_i32 = arith.constant 0 : i32
    %c0_i32_0 = arith.constant 0 : i32
    %c0_i32_1 = arith.constant 0 : i32
    return %c0_i32, %c0_i32_0 : i32, i32
  }
  func.func @transform_2(%arg0: i32) -> (i32, i32) {
    %c0_i32 = arith.constant 0 : i32
    %c0_i32_0 = arith.constant 0 : i32
    return %arg0, %c0_i32 : i32, i32
  }
}

</mosaic_0001>

<llo_original>
// kernel: tpu_custom_call.1
$region0: #{tpu_custom_call.1}
  #allocation0 [shape = 'u32[]', space=smem, size = 0x4, offset = 0x4, fixed_abs, tag = 'smem constant byte address 0x4 - core index']
  #allocation1 [shape = 'u32[72,128]{1,0:T(1,128)}', space=vmem, size = 0x9000, scoped, tag = 'internal scratch']
  %s0 = inlined_call_operand.hbm [shape: f32[8,16], index: 0, kind: input, shape index: {}]
  %s1 = inlined_call_operand.hbm [shape: f32[16,16], index: 1, kind: input, shape index: {}]
  %s2 = inlined_call_operand.hbm [shape: f32[8,16], index: 2, kind: output, shape index: {}]
  %s3 = sld [smem:[#allocation0]]
  $region26: #{tpu_custom_call.1} parent=0
    _
  %s5 = ssub.s32 1, %s3
  %s6 = scalar_select 0, %s5, %s3
  $region1: #{tpu_custom_call.1} parent=0
    #allocation2 [shape = 'u8[4096]{0}', space=vmem, size = 0x1000, scoped, tag = 'input window, operand 0, single buffered']
    #allocation3 [shape = 's32[1]{0}', space=sflag, size = 0x4, scoped, tag = 'scoped memory for tpu_custom_call.1']
    #allocation4 [shape = 's32[1]{0}', space=sflag, size = 0x4, scoped, tag = 'scoped memory for tpu_custom_call.1']
    #allocation5 [shape = 'u8[8192]{0}', space=vmem, size = 0x2000, scoped, tag = 'input window, operand 1, single buffered']
    #allocation6 [shape = 's32[1]{0}', space=sflag, size = 0x4, scoped, tag = 'scoped memory for tpu_custom_call.1']
    #allocation7 [shape = 'u8[4096]{0}', space=vmem, size = 0x1000, scoped, tag = 'output window, operand 0, single buffered']
    %7 = vsyncpa [#allocation3], 0
    %8 = vsyncpa [#allocation6], 0
    %9 = vsyncpa [#allocation4], 0
    // Predicated region
    $region2: #{tpu_custom_call.1} parent=1 // pred_check
      _
    $region3: #{tpu_custom_call.1} parent=1 // pred_check_branch
      %11 = sbr.rel (0) target = $region5
    $region4: #{tpu_custom_call.1} parent=1 // pred_region
      %13 = vsyncadd [#allocation3], 0
      %s15 = sshll.u32 %s0, 4
      %s16 = int_to_ptr.hbm [resolvable:$true] %s15
      %s17 = sshll.u32 [#allocation2], 4
      %s18 = int_to_ptr.vmem [resolvable:$true] %s17
      %20 = dma.hbm_to_vmem [thread:$0]  %s16, 128, %s18, [#allocation3]
    $region5: #{tpu_custom_call.1} parent=1 // pred_fallthru
      _
    // Predicated region
    $region6: #{tpu_custom_call.1} parent=1 // pred_check
      _
    $region7: #{tpu_custom_call.1} parent=1 // pred_check_branch
      %22 = sbr.rel (0) target = $region9
    $region8: #{tpu_custom_call.1} parent=1 // pred_region
      %24 = vsyncadd [#allocation6], 0
      %s25 = sshll.u32 %s1, 4
      %s26 = int_to_ptr.hbm [resolvable:$true] %s25
      %s27 = sshll.u32 [#allocation5], 4
      %s28 = int_to_ptr.vmem [resolvable:$true] %s27
      %33 = dma.hbm_to_vmem [thread:$0]  %s26, 256, %s28, [#allocation6], 128, 128, 8
    $region9: #{tpu_custom_call.1} parent=1 // pred_fallthru
      _
    // Predicated region
    $region10: #{tpu_custom_call.1} parent=1 // pred_check
      _
    $region11: #{tpu_custom_call.1} parent=1 // pred_check_branch
      %35 = sbr.rel (0) target = $region13
    $region12: #{tpu_custom_call.1} parent=1 // pred_region
      %37 = dma.done [#allocation3], 128
    $region13: #{tpu_custom_call.1} parent=1 // pred_fallthru
      _
    // Predicated region
    $region14: #{tpu_custom_call.1} parent=1 // pred_check
      _
    $region15: #{tpu_custom_call.1} parent=1 // pred_check_branch
      %39 = sbr.rel (0) target = $region17
    $region16: #{tpu_custom_call.1} parent=1 // pred_region
      %41 = dma.done [#allocation6], 256
    $region17: #{tpu_custom_call.1} parent=1 // pred_fallthru
      _
    %v42 = vld [vmem:[#allocation2] sm:$0xff]
    %v43 = vld [vmem:[#allocation5] sm:$0xff]
    %v44 = vld [vmem:[#allocation5 + $0x8] sm:$0xff]
    %vm45 = vcmask 130048
    %v47 = vsel %vm45, %v42, 0
    %49 = vmatpush.msra.mxu0 0.0
    %50 = vmatpush.msra.mxu0 0.0
    %51 = vmatpush.msra.mxu0 0.0
    %52 = vmatpush.msra.mxu0 0.0
    %53 = vmatpush.msra.mxu0 0.0
    %54 = vmatpush.msra.mxu0 0.0
    %55 = vmatpush.msra.mxu0 0.0
    %56 = vmatpush.msra.mxu0 0.0
    %57 = vmatpush.msra.mxu0 0.0
    %58 = vmatpush.msra.mxu0 0.0
    %59 = vmatpush.msra.mxu0 0.0
    %60 = vmatpush.msra.mxu0 0.0
    %61 = vmatpush.msra.mxu0 0.0
    %62 = vmatpush.msra.mxu0 0.0
    %63 = vmatpush.msra.mxu0 %v44
    %64 = vmatpush.msra.mxu0 %v43
    %65 = vmatmul.f32.gmra.mxu0 %v47
    %v66 = vpop.f32.mrf.mxu0
    %v67 = vadd.f32 0.0, %v66
    %68 = vdwg.mxu0
    %69 = vst.msk [vmem:[#allocation7] sm:$0xff] %vm45, %v67
    // Predicated region
    $region18: #{tpu_custom_call.1} parent=1 // pred_check
      _
    $region19: #{tpu_custom_call.1} parent=1 // pred_check_branch
      %71 = sbr.rel (0) target = $region21
    $region20: #{tpu_custom_call.1} parent=1 // pred_region
      %73 = vsyncadd [#allocation4], 0
      %s75 = sshll.u32 [#allocation7], 4
      %s76 = int_to_ptr.vmem [resolvable:$true] %s75
      %s77 = sshll.u32 %s2, 4
      %s78 = int_to_ptr.hbm [resolvable:$true] %s77
      %80 = dma.vmem_to_hbm [thread:$0]  %s76, 128, %s78, [#allocation4]
    $region21: #{tpu_custom_call.1} parent=1 // pred_fallthru
      _
    // Predicated region
    $region22: #{tpu_custom_call.1} parent=1 // pred_check
      _
    $region23: #{tpu_custom_call.1} parent=1 // pred_check_branch
      %82 = sbr.rel (0) target = $region25
    $region24: #{tpu_custom_call.1} parent=1 // pred_region
      %84 = dma.done [#allocation4], 128
    $region25: #{tpu_custom_call.1} parent=1 // pred_fallthru
      _
    %85 = vsyncpa [#allocation3], 1
    %86 = vsyncpa [#allocation6], 1
    %87 = vsyncpa [#allocation4], 1

</llo_original>
